<compile_context>
chip_gen: v7x
topology: tpu7x:2x2x1
jax: 0.10.0
libtpu: 0.0.40
codegen_flags: <defaults>
</compile_context>

<pallas_src>
import jax
import jax.numpy as jnp
from jax.experimental import pallas as pl
from jax.experimental.pallas import tpu as pltpu

# ---------------------------------------------------------------------------
# Problem sizes (CALayer(inout_ch=16, ch_reduction_ratio=4), small batch/spatial)
# ---------------------------------------------------------------------------
B, C, H, W = 2, 16, 16, 16
REDUCTION = 4
C_MID = C // REDUCTION          # squeeze channels
HW = H * W                      # 256  -> lane axis (2 full 128-lane tiles)
BC = B * C                      # 32   -> sublane axis
BM = B * C_MID                  # 8
NEG_SLOPE = 0.2                 # nn.LeakyReLU(negative_slope=0.2)

# Packed parameter buffer layout (single VMEM input):
#   rows 0:BM   , cols 0:BC      -> block-diag W1  (BM, BC)
#   rows 0:BM   , col  BC        -> b1             (BM, 1)
#   rows BM:BM+BC, cols 0:BM     -> block-diag W2  (BC, BM)
#   rows BM:BM+BC, col  BC       -> b2             (BC, 1)
P_ROWS = BM + BC                # 40
P_COLS = BC + 1                 # 33


def ca_layer_kernel(x_ref, p_ref, o_ref):
    """Whole batch in one invocation.

    x_ref : (B*C, H*W)          input, lane-dense (H*W = 256 lanes)
    p_ref : (P_ROWS, P_COLS)    packed params (block-diag W1/W2 + biases)
    o_ref : (B*C, H*W)          output (same lane-dense layout as input)
    """
    x = x_ref[...]                                               # (BC, HW) f32

    # Global average pool over the spatial (lane) axis -> narrow column vector.
    pooled = jnp.mean(x, axis=-1, keepdims=True)                 # (BC, 1)

    # Static slices into the packed parameter buffer (cheap VMEM views).
    w1 = p_ref[0:BM, 0:BC]                                       # (BM, BC)
    b1 = p_ref[0:BM, BC:BC + 1]                                  # (BM, 1)
    w2 = p_ref[BM:BM + BC, 0:BM]                                 # (BC, BM)
    b2 = p_ref[BM:BM + BC, BC:BC + 1]                            # (BC, 1)

    # Squeeze: 1x1 conv on the pooled vector, kept at N=1 (no lane broadcast).
    z = jnp.dot(w1, pooled, preferred_element_type=jnp.float32) + b1   # (BM, 1)
    z = jnp.where(z >= 0, z, NEG_SLOPE * z)                      # LeakyReLU(0.2)

    # Excite: second 1x1 conv + sigmoid gate, still N=1 (single EUP push).
    s = jnp.dot(w2, z, preferred_element_type=jnp.float32) + b2        # (BC, 1)
    s = jax.nn.sigmoid(s)                                        # (BC, 1)

    # Channel-wise rescale: gate broadcast across the 256 lanes only here.
    o_ref[...] = (x * s).astype(o_ref.dtype)


def prepare_ca_params(w1, b1, w2, b2):
    """One-time parameter packing (module-init time, NOT in the forward path).

    w1: (C_MID, C, 1, 1)   b1: (C_MID,)   w2: (C, C_MID, 1, 1)   b2: (C,)
    Returns one (P_ROWS, P_COLS) f32 buffer holding block-diagonal per-batch
    weights (so one N=1 matmul handles the whole batch) plus tiled biases.
    """
    w1m = w1.reshape(C_MID, C)
    w2m = w2.reshape(C, C_MID)
    eye_b = jnp.eye(B, dtype=jnp.float32)
    w1bd = jnp.kron(eye_b, w1m)                        # (BM, BC)
    w2bd = jnp.kron(eye_b, w2m)                        # (BC, BM)
    b1bd = jnp.tile(b1, B).reshape(BM, 1)
    b2bd = jnp.tile(b2, B).reshape(BC, 1)

    packed = jnp.zeros((P_ROWS, P_COLS), dtype=jnp.float32)
    packed = packed.at[0:BM, 0:BC].set(w1bd)
    packed = packed.at[0:BM, BC:BC + 1].set(b1bd)
    packed = packed.at[BM:BM + BC, 0:BM].set(w2bd)
    packed = packed.at[BM:BM + BC, BC:BC + 1].set(b2bd)
    return packed


def ca_layer_forward(x_nchw, packed_params):
    """CALayer forward.  x_nchw: (B, C, H, W) f32 -> (B, C, H, W) f32."""
    assert x_nchw.shape == (B, C, H, W), x_nchw.shape
    assert packed_params.shape == (P_ROWS, P_COLS), packed_params.shape

    # Metadata-only reshape: channels stay outer, H*W becomes the lane axis.
    x2d = x_nchw.reshape(BC, HW)

    out2d = pl.pallas_call(
        ca_layer_kernel,
        out_shape=jax.ShapeDtypeStruct((BC, HW), x_nchw.dtype),
        grid_spec=pltpu.PrefetchScalarGridSpec(
            num_scalar_prefetch=0,
            grid=(1,),                              # single step: whole batch at once
            in_specs=[
                pl.BlockSpec((BC, HW), lambda i: (0, 0)),
                pl.BlockSpec((P_ROWS, P_COLS), lambda i: (0, 0)),
            ],
            out_specs=pl.BlockSpec((BC, HW), lambda i: (0, 0)),
        ),
        compiler_params=pltpu.CompilerParams(
            dimension_semantics=("arbitrary",)),    # no point sharding a 1-step grid
    )(x2d, packed_params)

    return out2d.reshape(B, C, H, W)


def reference_forward(x, w1, b1, w2, b2):
    """Plain-JAX reference (matches PyTorch CALayer semantics)."""
    pooled = jnp.mean(x, axis=(2, 3))                              # (B, C)
    z = pooled @ w1.reshape(C_MID, C).T + b1                       # (B, C_MID)
    z = jnp.where(z >= 0, z, NEG_SLOPE * z)                        # LeakyReLU(0.2)
    s = jax.nn.sigmoid(z @ w2.reshape(C, C_MID).T + b2)            # (B, C)
    return x * s[:, :, None, None]


if __name__ == "__main__":
    key = jax.random.PRNGKey(0)
    kx, k1, kb1, k2, kb2 = jax.random.split(key, 5)

    x = jax.random.normal(kx, (B, C, H, W), dtype=jnp.float32)
    # Synthetic parameters with shapes from nn.Conv2d(16, 4, 1) / nn.Conv2d(4, 16, 1).
    w1 = jax.random.normal(k1, (C_MID, C, 1, 1), dtype=jnp.float32) * 0.1
    b1 = jax.random.normal(kb1, (C_MID,), dtype=jnp.float32) * 0.1
    w2 = jax.random.normal(k2, (C, C_MID, 1, 1), dtype=jnp.float32) * 0.1
    b2 = jax.random.normal(kb2, (C,), dtype=jnp.float32) * 0.1

    # One-time parameter prep (out of the forward hot path).
    packed = jax.block_until_ready(prepare_ca_params(w1, b1, w2, b2))

    out = ca_layer_forward(x, packed)
    out = jax.block_until_ready(out)

    ref = reference_forward(x, w1, b1, w2, b2)
    assert out.shape == (B, C, H, W)
    assert jnp.allclose(out, ref, atol=1e-4, rtol=1e-4), "mismatch vs reference CALayer"

    print("KERNEL_OK")
</pallas_src>

<mosaic_0001>
module attributes {stable_mosaic.version = 11 : i64} {
  func.func @ca_layer_kernel(%arg0: i32, %arg1: memref<32x256xf32, #tpu.memory_space<vmem>>, %arg2: memref<40x33xf32, #tpu.memory_space<vmem>>, %arg3: memref<32x256xf32, #tpu.memory_space<vmem>>) attributes {dimension_semantics = [#tpu.dimension_semantics<arbitrary>], iteration_bounds = array<i64: 1>, scalar_prefetch = 0 : i64, scratch_operands = 0 : i64, tpu.core_type = #tpu.core_type<tc>, window_params = [{pipeline_mode = #tpu.pipeline_mode<synchronous>, transform_indices = @transform_0, window_bounds = array<i64: 32, 256>}, {pipeline_mode = #tpu.pipeline_mode<synchronous>, transform_indices = @transform_1, window_bounds = array<i64: 40, 33>}, {pipeline_mode = #tpu.pipeline_mode<synchronous>, transform_indices = @transform_2, window_bounds = array<i64: 32, 256>}]} {
    %c0 = arith.constant 0 : index
    %c0_0 = arith.constant 0 : index
    %0 = vector.load %arg1[%c0, %c0_0] : memref<32x256xf32, #tpu.memory_space<vmem>>, vector<32x256xf32>
    %cst = arith.constant dense<0.000000e+00> : vector<32xf32>
    %1 = vector.multi_reduction <add>, %0, %cst [1] : vector<32x256xf32> to vector<32xf32>
    %2 = vector.shape_cast %1 : vector<32xf32> to vector<32x1xf32>
    %cst_1 = arith.constant 2.560000e+02 : f32
    %3 = vector.broadcast %cst_1 : f32 to vector<32x1xf32>
    %4 = arith.divf %2, %3 : vector<32x1xf32>
    %c0_2 = arith.constant 0 : index
    %c0_3 = arith.constant 0 : index
    %5 = vector.load %arg2[%c0_2, %c0_3] : memref<40x33xf32, #tpu.memory_space<vmem>>, vector<8x32xf32>
    %c0_4 = arith.constant 0 : index
    %c32 = arith.constant 32 : index
    %6 = vector.load %arg2[%c0_4, %c32] : memref<40x33xf32, #tpu.memory_space<vmem>>, vector<8x1xf32>
    %c8 = arith.constant 8 : index
    %c0_5 = arith.constant 0 : index
    %7 = vector.load %arg2[%c8, %c0_5] : memref<40x33xf32, #tpu.memory_space<vmem>>, vector<32x8xf32>
    %c8_6 = arith.constant 8 : index
    %c32_7 = arith.constant 32 : index
    %8 = vector.load %arg2[%c8_6, %c32_7] : memref<40x33xf32, #tpu.memory_space<vmem>>, vector<32x1xf32>
    %cst_8 = arith.constant dense<0.000000e+00> : vector<8x1xf32>
    %9 = tpu.matmul %5, %4, %cst_8 {dimension_numbers = #tpu.dot_dimension_numbers<[1], [0], [0], [1], [0, 0, 1, 1], [], []>} : vector<8x32xf32>, vector<32x1xf32>, vector<8x1xf32> -> vector<8x1xf32>
    %10 = arith.addf %9, %6 : vector<8x1xf32>
    %cst_9 = arith.constant 0.000000e+00 : f32
    %11 = vector.broadcast %cst_9 : f32 to vector<8x1xf32>
    %12 = arith.cmpf oge, %10, %11 : vector<8x1xf32>
    %cst_10 = arith.constant 2.000000e-01 : f32
    %13 = vector.broadcast %cst_10 : f32 to vector<8x1xf32>
    %14 = arith.mulf %13, %10 : vector<8x1xf32>
    %15 = arith.select %12, %10, %14 : vector<8x1xi1>, vector<8x1xf32>
    %cst_11 = arith.constant dense<0.000000e+00> : vector<32x1xf32>
    %16 = tpu.matmul %7, %15, %cst_11 {dimension_numbers = #tpu.dot_dimension_numbers<[1], [0], [0], [1], [0, 0, 1, 1], [], []>} : vector<32x8xf32>, vector<8x1xf32>, vector<32x1xf32> -> vector<32x1xf32>
    %17 = arith.addf %16, %8 : vector<32x1xf32>
    %18 = arith.negf %17 : vector<32x1xf32>
    %19 = math.exp %18 : vector<32x1xf32>
    %cst_12 = arith.constant 1.000000e+00 : f32
    %20 = vector.broadcast %cst_12 : f32 to vector<32x1xf32>
    %21 = arith.addf %20, %19 : vector<32x1xf32>
    %22 = arith.divf %20, %21 : vector<32x1xf32>
    %23 = vector.broadcast %22 : vector<32x1xf32> to vector<32x256xf32>
    %24 = arith.mulf %0, %23 : vector<32x256xf32>
    %c0_13 = arith.constant 0 : index
    %c0_14 = arith.constant 0 : index
    %25 = vector.load %arg3[%c0_13, %c0_14] : memref<32x256xf32, #tpu.memory_space<vmem>>, vector<32x256xf32>
    tpu.vector_store %arg3[%c0_13, %c0_14], %24 {strides = array<i32>} : memref<32x256xf32, #tpu.memory_space<vmem>>, vector<32x256xf32>,
    return
  }
  func.func @transform_0(%arg0: i32) -> (i32, i32) {
    %c0_i32 = arith.constant 0 : i32
    %c0_i32_0 = arith.constant 0 : i32
    %c0_i32_1 = arith.constant 0 : i32
    return %c0_i32, %c0_i32_0 : i32, i32
  }
  func.func @transform_1(%arg0: i32) -> (i32, i32) {
    %c0_i32 = arith.constant 0 : i32
    %c0_i32_0 = arith.constant 0 : i32
    %c0_i32_1 = arith.constant 0 : i32
    return %c0_i32, %c0_i32_0 : i32, i32
  }
  func.func @transform_2(%arg0: i32) -> (i32, i32) {
    %c0_i32 = arith.constant 0 : i32
    %c0_i32_0 = arith.constant 0 : i32
    %c0_i32_1 = arith.constant 0 : i32
    return %c0_i32, %c0_i32_0 : i32, i32
  }
}

</mosaic_0001>

<llo_original>
// kernel: tpu_custom_call.1
$region0: #{tpu_custom_call.1}
  #allocation0 [shape = 'u32[]', space=smem, size = 0x4, offset = 0x4, fixed_abs, tag = 'smem constant byte address 0x4 - core index']
  #allocation1 [shape = 'u32[144,128]{1,0:T(1,128)}', space=vmem, size = 0x12000, scoped, tag = 'internal scratch']
  %s0 = inlined_call_operand.hbm [shape: f32[32,256], index: 0, kind: input, shape index: {}]
  %s1 = inlined_call_operand.hbm [shape: f32[40,33], index: 1, kind: input, shape index: {}]
  %s2 = inlined_call_operand.hbm [shape: f32[32,256], index: 2, kind: output, shape index: {}]
  %s3 = sld [smem:[#allocation0]]
  $region26: #{tpu_custom_call.1} parent=0
    _
  %s5 = ssub.s32 1, %s3
  %s6 = scalar_select 0, %s5, %s3
  $region1: #{tpu_custom_call.1} parent=0
    #allocation2 [shape = 'u8[32768]{0}', space=vmem, size = 0x8000, scoped, tag = 'input window, operand 0, single buffered']
    #allocation3 [shape = 's32[1]{0}', space=sflag, size = 0x4, scoped, tag = 'scoped memory for tpu_custom_call.1']
    #allocation4 [shape = 's32[1]{0}', space=sflag, size = 0x4, scoped, tag = 'scoped memory for tpu_custom_call.1']
    #allocation5 [shape = 'u8[20480]{0}', space=vmem, size = 0x5000, scoped, tag = 'input window, operand 1, single buffered']
    #allocation6 [shape = 's32[1]{0}', space=sflag, size = 0x4, scoped, tag = 'scoped memory for tpu_custom_call.1']
    #allocation7 [shape = 'u8[32768]{0}', space=vmem, size = 0x8000, scoped, tag = 'output window, operand 0, single buffered']
    %7 = vsyncpa [#allocation3], 0
    %8 = vsyncpa [#allocation6], 0
    %9 = vsyncpa [#allocation4], 0
    // Predicated region
    $region2: #{tpu_custom_call.1} parent=1 // pred_check
      _
    $region3: #{tpu_custom_call.1} parent=1 // pred_check_branch
      %11 = sbr.rel (0) target = $region5
    $region4: #{tpu_custom_call.1} parent=1 // pred_region
      %s13 = ssub.s32 1024, 1024
      %14 = vsyncadd [#allocation3], %s13
      %s15 = sshll.u32 [#allocation2], 4
      %s16 = int_to_ptr.vmem [resolvable:$true] %s15
      %21 = dma.hbm_to_vmem [thread:$0]  %s0, 1024, %s16, [#allocation3], 256, 256, 16
    $region5: #{tpu_custom_call.1} parent=1 // pred_fallthru
      _
    // Predicated region
    $region6: #{tpu_custom_call.1} parent=1 // pred_check
      _
    $region7: #{tpu_custom_call.1} parent=1 // pred_check_branch
      %23 = sbr.rel (0) target = $region9
    $region8: #{tpu_custom_call.1} parent=1 // pred_region
      %s25 = ssub.s32 640, 640
      %26 = vsyncadd [#allocation6], %s25
      %s27 = sshll.u32 [#allocation5], 4
      %s28 = int_to_ptr.vmem [resolvable:$true] %s27
      %33 = dma.hbm_to_vmem [thread:$0]  %s1, 640, %s28, [#allocation6], 128, 128, 8
    $region9: #{tpu_custom_call.1} parent=1 // pred_fallthru
      _
    // Predicated region
    $region10: #{tpu_custom_call.1} parent=1 // pred_check
      _
    $region11: #{tpu_custom_call.1} parent=1 // pred_check_branch
      %35 = sbr.rel (0) target = $region13
    $region12: #{tpu_custom_call.1} parent=1 // pred_region
      %36 = dma.done [#allocation3], 1024
    $region13: #{tpu_custom_call.1} parent=1 // pred_fallthru
      _
    // Predicated region
    $region14: #{tpu_custom_call.1} parent=1 // pred_check
      _
    $region15: #{tpu_custom_call.1} parent=1 // pred_check_branch
      %38 = sbr.rel (0) target = $region17
    $region16: #{tpu_custom_call.1} parent=1 // pred_region
      %39 = dma.done [#allocation6], 640
    $region17: #{tpu_custom_call.1} parent=1 // pred_fallthru
      _
    %v40 = vld [vmem:[#allocation2] sm:$0xff]
    %v41 = vld [vmem:[#allocation2 + $0x8] sm:$0xff]
    %v42 = vld [vmem:[#allocation2 + $0x10] sm:$0xff]
    %v43 = vld [vmem:[#allocation2 + $0x18] sm:$0xff]
    %v44 = vld [vmem:[#allocation2 + $0x20] sm:$0xff]
    %v45 = vld [vmem:[#allocation2 + $0x28] sm:$0xff]
    %v46 = vld [vmem:[#allocation2 + $0x30] sm:$0xff]
    %v47 = vld [vmem:[#allocation2 + $0x38] sm:$0xff]
    %v48 = vadd.f32 %v40, %v41
    %49 = vadd.xlane.f32.xlu0 %v48
    %v50 = vpop.xlane.xlu0 %49
    %v51 = vadd.f32 %v42, %v43
    %52 = vadd.xlane.f32.xlu0 %v51
    %v53 = vpop.xlane.xlu0 %52
    %v54 = vadd.f32 %v44, %v45
    %55 = vadd.xlane.f32.xlu0 %v54
    %v56 = vpop.xlane.xlu0 %55
    %v57 = vadd.f32 %v46, %v47
    %58 = vadd.xlane.f32.xlu0 %v57
    %v59 = vpop.xlane.xlu0 %58
    %v60 = vrcp.pop 256.0
    %v61 = vmul.f32 %v50, %v60
    %v62 = vmul.f32 %v53, %v60
    %v63 = vmul.f32 %v56, %v60
    %v64 = vmul.f32 %v59, %v60
    %v65 = vld [vmem:[#allocation5] sm:$0xff]
    %v66 = vld [vmem:[#allocation5 + $0x8] sm:$0xff]
    %v67 = vld [vmem:[#allocation5 + $0x10] sm:$0xff]
    %v68 = vld [vmem:[#allocation5 + $0x18] sm:$0xff]
    %v69 = vld [vmem:[#allocation5 + $0x20] sm:$0xff]
    %71 = vrot.lane.b32.xlu0 %v65, 96
    %v72 = vpop.permute.xlu0 %71
    %vm74 = vcmask 261120
    %v75 = vsel %vm74, %v65, 0
    %77 = vmatprep.subr.mxu0 0.0
    %78 = vmatpush1.msra.mxu0 %v61
    %79 = vmatprep.subr.mxu0 0.0
    %80 = vmatpush1.msra.mxu0 %v62
    %81 = vmatprep.subr.mxu0 0.0
    %82 = vmatpush1.msra.mxu0 %v63
    %83 = vmatprep.subr.mxu0 0.0
    %84 = vmatpush1.msra.mxu0 %v64
    %85 = vmatprep.subr.mxu0 0.0
    %86 = vmatpush1.msra.mxu0 0.0
    %87 = vmatprep.subr.mxu0 0.0
    %88 = vmatpush1.msra.mxu0 0.0
    %89 = vmatprep.subr.mxu0 0.0
    %90 = vmatpush1.msra.mxu0 0.0
    %91 = vmatprep.subr.mxu0 0.0
    %92 = vmatpush1.msra.mxu0 0.0
    %93 = vmatprep.subr.mxu0 0.0
    %94 = vmatpush1.msra.mxu0 0.0
    %95 = vmatprep.subr.mxu0 0.0
    %96 = vmatpush1.msra.mxu0 0.0
    %97 = vmatprep.subr.mxu0 0.0
    %98 = vmatpush1.msra.mxu0 0.0
    %99 = vmatprep.subr.mxu0 0.0
    %100 = vmatpush1.msra.mxu0 0.0
    %101 = vmatprep.subr.mxu0 0.0
    %102 = vmatpush1.msra.mxu0 0.0
    %103 = vmatprep.subr.mxu0 0.0
    %104 = vmatpush1.msra.mxu0 0.0
    %105 = vmatprep.subr.mxu0 0.0
    %106 = vmatpush1.msra.mxu0 0.0
    %107 = vmatprep.subr.mxu0 0.0
    %108 = vmatpush1.msra.mxu0 0.0
    %109 = vmatprep.subr.mxu0 0.0
    %110 = vmatpush1.msra.mxu0 0.0
    %111 = vmatprep.subr.mxu0 0.0
    %112 = vmatpush1.msra.mxu0 0.0
    %113 = vmatprep.subr.mxu0 0.0
    %114 = vmatpush1.msra.mxu0 0.0
    %115 = vmatprep.subr.mxu0 0.0
    %116 = vmatpush1.msra.mxu0 0.0
    %117 = vmatprep.subr.mxu0 0.0
    %118 = vmatpush1.msra.mxu0 0.0
    %119 = vmatprep.subr.mxu0 0.0
    %120 = vmatpush1.msra.mxu0 0.0
    %121 = vmatprep.subr.mxu0 0.0
    %122 = vmatpush1.msra.mxu0 0.0
    %123 = vmatprep.subr.mxu0 0.0
    %124 = vmatpush1.msra.mxu0 0.0
    %125 = vmatprep.subr.mxu0 0.0
    %126 = vmatpush1.msra.mxu0 0.0
    %127 = vmatprep.subr.mxu0 0.0
    %128 = vmatpush1.msra.mxu0 0.0
    %129 = vmatprep.subr.mxu0 0.0
    %130 = vmatpush1.msra.mxu0 0.0
    %131 = vmatprep.subr.mxu0 0.0
    %132 = vmatpush1.msra.mxu0 0.0
    %133 = vmatprep.subr.mxu0 0.0
    %134 = vmatpush1.msra.mxu0 0.0
    %135 = vmatprep.subr.mxu0 0.0
    %136 = vmatpush1.msra.mxu0 0.0
    %137 = vmatprep.subr.mxu0 0.0
    %138 = vmatpush1.msra.mxu0 0.0
    %139 = vmatprep.subr.mxu0 0.0
    %140 = vmatpush1.msra.mxu0 0.0
    %141 = vmatprep.mubr.f32.mxu0 0.0
    %142 = vmatmul.mubr.f32.gmra.mrb[0].mxu0 %v75
    %v143 = vpop.f32.mrb[0].mxu0
    %v144 = vadd.f32 %v72, %v143
    %v145 = vpop.f32.mrb[0].mxu0
    %146 = vdwg.mxu0
    %vm147 = vcmp.ge.f32.partialorder %v144, 0.0
    %v148 = vmul.f32 %v144, 0.2
    %v149 = vsel %vm147, %v144, %v148
    %154 = vrot.lane.b32.xlu0 %v66, 96
    %v155 = vpop.permute.xlu0 %154
    %156 = vrot.lane.b32.xlu0 %v67, 96
    %v157 = vpop.permute.xlu0 %156
    %158 = vrot.lane.b32.xlu0 %v68, 96
    %v159 = vpop.permute.xlu0 %158
    %160 = vrot.lane.b32.xlu0 %v69, 96
    %v161 = vpop.permute.xlu0 %160
    %vm166 = vcmask 64512
    %v167 = vsel %vm166, %v66, 0
    %v169 = vsel %vm166, %v67, 0
    %v171 = vsel %vm166, %v68, 0
    %v173 = vsel %vm166, %v69, 0
    %175 = vmatprep.subr.mxu0 0.0
    %176 = vmatpush1.msra.mxu0 %v149
    %177 = vmatprep.subr.mxu0 0.0
    %178 = vmatpush1.msra.mxu0 0.0
    %179 = vmatprep.subr.mxu0 0.0
    %180 = vmatpush1.msra.mxu0 0.0
    %181 = vmatprep.subr.mxu0 0.0
    %182 = vmatpush1.msra.mxu0 0.0
    %183 = vmatprep.subr.mxu0 0.0
    %184 = vmatpush1.msra.mxu0 0.0
    %185 = vmatprep.subr.mxu0 0.0
    %186 = vmatpush1.msra.mxu0 0.0
    %187 = vmatprep.subr.mxu0 0.0
    %188 = vmatpush1.msra.mxu0 0.0
    %189 = vmatprep.subr.mxu0 0.0
    %190 = vmatpush1.msra.mxu0 0.0
    %191 = vmatprep.subr.mxu0 0.0
    %192 = vmatpush1.msra.mxu0 0.0
    %193 = vmatprep.subr.mxu0 0.0
    %194 = vmatpush1.msra.mxu0 0.0
    %195 = vmatprep.subr.mxu0 0.0
    %196 = vmatpush1.msra.mxu0 0.0
    %197 = vmatprep.subr.mxu0 0.0
    %198 = vmatpush1.msra.mxu0 0.0
    %199 = vmatprep.subr.mxu0 0.0
    %200 = vmatpush1.msra.mxu0 0.0
    %201 = vmatprep.subr.mxu0 0.0
    %202 = vmatpush1.msra.mxu0 0.0
    %203 = vmatprep.subr.mxu0 0.0
    %204 = vmatpush1.msra.mxu0 0.0
    %205 = vmatprep.subr.mxu0 0.0
    %206 = vmatpush1.msra.mxu0 0.0
    %207 = vmatprep.subr.mxu0 0.0
    %208 = vmatpush1.msra.mxu0 0.0
    %209 = vmatprep.subr.mxu0 0.0
    %210 = vmatpush1.msra.mxu0 0.0
    %211 = vmatprep.subr.mxu0 0.0
    %212 = vmatpush1.msra.mxu0 0.0
    %213 = vmatprep.subr.mxu0 0.0
    %214 = vmatpush1.msra.mxu0 0.0
    %215 = vmatprep.subr.mxu0 0.0
    %216 = vmatpush1.msra.mxu0 0.0
    %217 = vmatprep.subr.mxu0 0.0
    %218 = vmatpush1.msra.mxu0 0.0
    %219 = vmatprep.subr.mxu0 0.0
    %220 = vmatpush1.msra.mxu0 0.0
    %221 = vmatprep.subr.mxu0 0.0
    %222 = vmatpush1.msra.mxu0 0.0
    %223 = vmatprep.subr.mxu0 0.0
    %224 = vmatpush1.msra.mxu0 0.0
    %225 = vmatprep.subr.mxu0 0.0
    %226 = vmatpush1.msra.mxu0 0.0
    %227 = vmatprep.subr.mxu0 0.0
    %228 = vmatpush1.msra.mxu0 0.0
    %229 = vmatprep.subr.mxu0 0.0
    %230 = vmatpush1.msra.mxu0 0.0
    %231 = vmatprep.subr.mxu0 0.0
    %232 = vmatpush1.msra.mxu0 0.0
    %233 = vmatprep.subr.mxu0 0.0
    %234 = vmatpush1.msra.mxu0 0.0
    %235 = vmatprep.subr.mxu0 0.0
    %236 = vmatpush1.msra.mxu0 0.0
    %237 = vmatprep.subr.mxu0 0.0
    %238 = vmatpush1.msra.mxu0 0.0
    %239 = vmatprep.mubr.f32.mxu0 0.0
    %240 = vmatmul.mubr.f32.gmra.mrb[0].mxu0 %v167
    %v241 = vpop.f32.mrb[0].mxu0
    %v242 = vadd.f32 %v155, %v241
    %v243 = vpop.f32.mrb[0].mxu0
    %244 = vmatprep.mubr.f32.mxu0 0.0
    %245 = vmatmul.mubr.f32.gmra.mrb[0].mxu0 %v169
    %v246 = vpop.f32.mrb[0].mxu0
    %v247 = vadd.f32 %v157, %v246
    %v248 = vpop.f32.mrb[0].mxu0
    %249 = vmatprep.mubr.f32.mxu0 0.0
    %250 = vmatmul.mubr.f32.gmra.mrb[0].mxu0 %v171
    %v251 = vpop.f32.mrb[0].mxu0
    %v252 = vadd.f32 %v159, %v251
    %v253 = vpop.f32.mrb[0].mxu0
    %254 = vmatprep.mubr.f32.mxu0 0.0
    %255 = vmatmul.mubr.f32.gmra.mrb[0].mxu0 %v173
    %v256 = vpop.f32.mrb[0].mxu0
    %v257 = vadd.f32 %v161, %v256
    %v258 = vpop.f32.mrb[0].mxu0
    %259 = vdwg.mxu0
    %v260 = vxor.u32 %v242, 2147483648
    %v261 = vxor.u32 %v247, 2147483648
    %v262 = vxor.u32 %v252, 2147483648
    %v263 = vxor.u32 %v257, 2147483648
    %v264 = vmul.f32 %v260, 1.442695
    %v265 = vpow.pop %v264
    %v266 = vmul.f32 %v261, 1.442695
    %v267 = vpow.pop %v266
    %v268 = vmul.f32 %v262, 1.442695
    %v269 = vpow.pop %v268
    %v270 = vmul.f32 %v263, 1.442695
    %v271 = vpow.pop %v270
    %v272 = vadd.f32 %v265, 1.0
    %v273 = vadd.f32 %v267, 1.0
    %v274 = vadd.f32 %v269, 1.0
    %v275 = vadd.f32 %v271, 1.0
    %v276 = vrcp.pop %v272
    %v277 = vmul.f32 1.0, %v276
    %v278 = vrcp.pop %v273
    %v279 = vmul.f32 1.0, %v278
    %v280 = vrcp.pop %v274
    %v281 = vmul.f32 1.0, %v280
    %v282 = vrcp.pop %v275
    %v283 = vmul.f32 1.0, %v282
    %285 = vset.pattern.permute.xlu0 0
    %286 = vperm.xlu0 %285, %v277
    %v287 = vpop.permute.xlu0 %286
    %290 = vset.pattern.permute.xlu0 0
    %291 = vperm.xlu0 %290, %v279
    %v292 = vpop.permute.xlu0 %291
    %295 = vset.pattern.permute.xlu0 0
    %296 = vperm.xlu0 %295, %v281
    %v297 = vpop.permute.xlu0 %296
    %300 = vset.pattern.permute.xlu0 0
    %301 = vperm.xlu0 %300, %v283
    %v302 = vpop.permute.xlu0 %301
    %v304 = vmul.f32 %v40, %v287
    %v305 = vmul.f32 %v41, %v287
    %v306 = vmul.f32 %v42, %v292
    %v307 = vmul.f32 %v43, %v292
    %v308 = vmul.f32 %v44, %v297
    %v309 = vmul.f32 %v45, %v297
    %v310 = vmul.f32 %v46, %v302
    %v311 = vmul.f32 %v47, %v302
    %312 = vst [vmem:[#allocation7] sm:$0xff] %v304
    %313 = vst [vmem:[#allocation7 + $0x8] sm:$0xff] %v305
    %314 = vst [vmem:[#allocation7 + $0x10] sm:$0xff] %v306
    %315 = vst [vmem:[#allocation7 + $0x18] sm:$0xff] %v307
    %316 = vst [vmem:[#allocation7 + $0x20] sm:$0xff] %v308
    %317 = vst [vmem:[#allocation7 + $0x28] sm:$0xff] %v309
    %318 = vst [vmem:[#allocation7 + $0x30] sm:$0xff] %v310
    %319 = vst [vmem:[#allocation7 + $0x38] sm:$0xff] %v311
    // Predicated region
    $region18: #{tpu_custom_call.1} parent=1 // pred_check
      _
    $region19: #{tpu_custom_call.1} parent=1 // pred_check_branch
      %321 = sbr.rel (0) target = $region21
    $region20: #{tpu_custom_call.1} parent=1 // pred_region
      %s323 = ssub.s32 1024, 1024
      %324 = vsyncadd [#allocation4], %s323
      %s325 = sshll.u32 [#allocation7], 4
      %s326 = int_to_ptr.vmem [resolvable:$true] %s325
      %331 = dma.vmem_to_hbm [thread:$0]  %s326, 1024, %s2, [#allocation4], 256, 256, 16
    $region21: #{tpu_custom_call.1} parent=1 // pred_fallthru
      _
    // Predicated region
    $region22: #{tpu_custom_call.1} parent=1 // pred_check
      _
    $region23: #{tpu_custom_call.1} parent=1 // pred_check_branch
      %333 = sbr.rel (0) target = $region25
    $region24: #{tpu_custom_call.1} parent=1 // pred_region
      %334 = dma.done [#allocation4], 1024
    $region25: #{tpu_custom_call.1} parent=1 // pred_fallthru
      _
    %335 = vsyncpa [#allocation3], 1
    %336 = vsyncpa [#allocation6], 1
    %337 = vsyncpa [#allocation4], 1

</llo_original>
